<compile_context>
chip_gen: v7x
topology: tpu7x:2x2x1
jax: 0.10.0
libtpu: 0.0.40
codegen_flags: <defaults>
</compile_context>

<pallas_src>
import jax
import jax.numpy as jnp
from jax.experimental import pallas as pl
from jax.experimental.pallas import tpu as pltpu


def _round_up(v, m):
    return ((v + m - 1) // m) * m


def _pick_batch_tile(b_pad, batch_tile):
    tm = min(batch_tile, b_pad)
    # Keep >= 2 grid steps when the batch allows so a 2-TensorCore chip
    # (v7x megacore) can actually split the "parallel" batch axis.
    if b_pad >= 16:
        tm = min(tm, _round_up((b_pad + 1) // 2, 8))
    if tm >= 128:
        tm = (tm // 128) * 128          # full 128-row MXU tiles when large
    return max(8, _round_up(tm, 8))


def _make_fused_kernel(num_layers, dot_precision, compute_dtype):
    """Kernel applying `num_layers` routing layers to one batch tile."""

    def kernel(*refs):
        x_ref = refs[0]                         # (tm, wpads[0]) compute_dtype
        routing_refs = refs[1:1 + num_layers]   # layer l: (wpads[l], wpads[l+1])
        o_ref = refs[1 + num_layers]            # (tm, wpads[-1]) f32

        x = x_ref[...]
        for l in range(num_layers):
            # All ants at node i hop to neuron dest[i]; with a one-hot routing
            # matrix this is a single matmul the MXU accumulates internally.
            y = jnp.dot(
                x,
                routing_refs[l][...],
                preferred_element_type=jnp.float32,
                precision=dot_precision,
            )
            # layer.relu_func is a no-op: counts >= 0 and routing is {0, 1}.
            if l + 1 < num_layers:
                x = y.astype(compute_dtype)
            else:
                o_ref[...] = y.astype(o_ref.dtype)

    return kernel


def ant_model_forward(x, layer_weights, *, batch_tile=512, max_count=None):
    """Forward pass of AntModel.

    x: (batch, n_input_nodes) non-negative ant counts (any numeric dtype).
    layer_weights: list of (n_in, n_out) float32 pheromone matrices
        (n_in of layer l+1 must equal n_out of layer l).
    max_count: optional upper bound on any per-node ant count.  If given and
        <= 256, the exact bf16 x bf16 -> f32 MXU path is used; otherwise the
        kernel stays in f32 with precision=HIGHEST (exact for integer counts
        up to 2^24).
    Returns float32 (batch, n_outputs_of_last_layer) ant tallies.
    """
    x = jnp.asarray(x).astype(jnp.int32)          # x.to(dtype=torch.int)
    B, n_in0 = x.shape

    widths = [n_in0] + [int(w.shape[1]) for w in layer_weights]
    for l, w in enumerate(layer_weights):
        assert int(w.shape[0]) == widths[l], "layer width chain mismatch"
    num_layers = len(layer_weights)
    if num_layers == 0:
        return x.astype(jnp.float32)

    if max_count is not None and max_count <= 256:
        compute_dtype, dot_precision = jnp.bfloat16, None
    else:
        compute_dtype, dot_precision = jnp.float32, jax.lax.Precision.HIGHEST
    itemsize = jnp.dtype(compute_dtype).itemsize

    # Per-layer padded widths: lane-dense (multiple of 128) per layer.
    wpads = [max(128, _round_up(w, 128)) for w in widths]

    b_pad = max(8, _round_up(B, 8))
    tm = _pick_batch_tile(b_pad, batch_tile)

    def _vmem_estimate(tm_):
        est = 2 * tm_ * wpads[0] * itemsize       # x (double-buffered)
        est += 2 * tm_ * wpads[-1] * 4            # out (double-buffered, f32)
        for l in range(num_layers):               # resident routing matrices
            est += 2 * wpads[l] * wpads[l + 1] * itemsize
        return est

    budget = 44 * 1024 * 1024                     # keeps us under v7x's 64 MiB
    while tm > 8 and _vmem_estimate(tm) > budget:
        tm = max(8, _round_up(tm // 2, 8))
    vmem_limit = int(min(48 * 1024 * 1024,
                         max(32 * 1024 * 1024, _vmem_estimate(tm) + (2 << 20))))

    b_grid = -(-b_pad // tm)
    b_pad = b_grid * tm

    x_p = (jnp.zeros((b_pad, wpads[0]), compute_dtype)
           .at[:B, :n_in0].set(x.astype(compute_dtype)))

    # Batch-invariant routing matrices: dest[i] = argmax_j W[i, j].
    # Built once per call; the constant index_map keeps each one resident in
    # VMEM across every batch tile (a single HBM->VMEM DMA per layer per core),
    # so no iota/compare/cast work is ever done inside the kernel.
    routings = []
    for l, w in enumerate(layer_weights):
        n_in, n_out = int(w.shape[0]), int(w.shape[1])
        dest = jnp.argmax(jnp.asarray(w, jnp.float32), axis=1)
        one_hot = jax.nn.one_hot(dest, n_out, dtype=compute_dtype)
        routings.append(
            jnp.zeros((wpads[l], wpads[l + 1]), compute_dtype)
            .at[:n_in, :n_out].set(one_hot))       # padded rows/cols stay 0

    in_specs = [pl.BlockSpec((tm, wpads[0]), lambda i: (i, 0))]
    for l in range(num_layers):
        in_specs.append(
            pl.BlockSpec((wpads[l], wpads[l + 1]), lambda i: (0, 0)))
    out_specs = pl.BlockSpec((tm, wpads[-1]), lambda i: (i, 0))

    out = pl.pallas_call(
        _make_fused_kernel(num_layers, dot_precision, compute_dtype),
        out_shape=jax.ShapeDtypeStruct((b_pad, wpads[-1]), jnp.float32),
        grid_spec=pltpu.PrefetchScalarGridSpec(
            num_scalar_prefetch=0,
            grid=(b_grid,),
            in_specs=in_specs,
            out_specs=out_specs,
        ),
        compiler_params=pltpu.CompilerParams(
            dimension_semantics=("parallel",),     # megacore split on v7x
            vmem_limit_bytes=vmem_limit,
        ),
    )(x_p, *routings)

    return out[:B, : widths[-1]].astype(jnp.float32)


def _reference_forward(x, layer_weights):
    # Pure-JAX reference for correctness checking.
    x = jnp.asarray(x).astype(jnp.int32).astype(jnp.float32)
    for w in layer_weights:
        dest = jnp.argmax(w, axis=1)
        routing = jax.nn.one_hot(dest, w.shape[1], dtype=jnp.float32)
        x = jnp.maximum(x @ routing, 0.0)
    return x


if __name__ == "__main__":
    key = jax.random.PRNGKey(0)
    k_x, k_w1, k_w2 = jax.random.split(key, 3)

    batch, n_in, n_hidden, n_out = 2, 16, 32, 8

    # Ant counts per input node: small non-negative integers.
    x = jax.random.randint(k_x, (batch, n_in), minval=0, maxval=5).astype(jnp.float32)

    # Deterministic pheromone weights for two layers: 16 -> 32 -> 8.
    w1 = jax.random.uniform(k_w1, (n_in, n_hidden), dtype=jnp.float32)
    w2 = jax.random.uniform(k_w2, (n_hidden, n_out), dtype=jnp.float32)
    layer_weights = [w1, w2]

    ref = _reference_forward(x, layer_weights)

    # Exact-f32 path (no count bound assumed): precision=HIGHEST matmuls.
    out_f32 = jax.block_until_ready(ant_model_forward(x, layer_weights))
    # bf16 MXU path: total ants per row <= n_in * 4 = 64 <= 256, so every
    # per-node count anywhere in the network is exactly representable in bf16.
    out_bf16 = jax.block_until_ready(
        ant_model_forward(x, layer_weights, max_count=int(n_in * 4)))

    row_totals = jnp.sum(jnp.asarray(x).astype(jnp.int32).astype(jnp.float32), axis=1)
    for out in (out_f32, out_bf16):
        assert out.shape == (batch, n_out), out.shape
        assert out.dtype == jnp.float32
        assert jnp.allclose(out, ref), (out, ref)
        # Ant conservation sanity check (no ants lost before any ReLU zeroing).
        assert jnp.allclose(jnp.sum(out, axis=1), row_totals)

    print("KERNEL_OK")
</pallas_src>

<mosaic_0001>
module attributes {stable_mosaic.version = 11 : i64} {
  func.func @kernel(%arg0: i32, %arg1: memref<8x128xf32, #tpu.memory_space<vmem>>, %arg2: memref<128x128xf32, #tpu.memory_space<vmem>>, %arg3: memref<128x128xf32, #tpu.memory_space<vmem>>, %arg4: memref<8x128xf32, #tpu.memory_space<vmem>>) attributes {dimension_semantics = [#tpu.dimension_semantics<parallel>], iteration_bounds = array<i64: 1>, scalar_prefetch = 0 : i64, scratch_operands = 0 : i64, tpu.core_type = #tpu.core_type<tc>, window_params = [{transform_indices = @transform_0, window_bounds = array<i64: 8, 128>}, {pipeline_mode = #tpu.pipeline_mode<synchronous>, transform_indices = @transform_1, window_bounds = array<i64: 128, 128>}, {pipeline_mode = #tpu.pipeline_mode<synchronous>, transform_indices = @transform_2, window_bounds = array<i64: 128, 128>}, {transform_indices = @transform_3, window_bounds = array<i64: 8, 128>}]} {
    %c0 = arith.constant 0 : index
    %c0_0 = arith.constant 0 : index
    %0 = vector.load %arg1[%c0, %c0_0] : memref<8x128xf32, #tpu.memory_space<vmem>>, vector<8x128xf32>
    %c0_1 = arith.constant 0 : index
    %c0_2 = arith.constant 0 : index
    %1 = vector.load %arg2[%c0_1, %c0_2] : memref<128x128xf32, #tpu.memory_space<vmem>>, vector<128x128xf32>
    %cst = arith.constant dense<0.000000e+00> : vector<8x128xf32>
    %2 = tpu.matmul %0, %1, %cst {dimension_numbers = #tpu.dot_dimension_numbers<[1], [0], [0], [1], [0, 0, 1, 1], [], []>, precision = #tpu.contract_precision<fp32>} : vector<8x128xf32>, vector<128x128xf32>, vector<8x128xf32> -> vector<8x128xf32>
    %c0_3 = arith.constant 0 : index
    %c0_4 = arith.constant 0 : index
    %3 = vector.load %arg3[%c0_3, %c0_4] : memref<128x128xf32, #tpu.memory_space<vmem>>, vector<128x128xf32>
    %cst_5 = arith.constant dense<0.000000e+00> : vector<8x128xf32>
    %4 = tpu.matmul %2, %3, %cst_5 {dimension_numbers = #tpu.dot_dimension_numbers<[1], [0], [0], [1], [0, 0, 1, 1], [], []>, precision = #tpu.contract_precision<fp32>} : vector<8x128xf32>, vector<128x128xf32>, vector<8x128xf32> -> vector<8x128xf32>
    %c0_6 = arith.constant 0 : index
    %c0_7 = arith.constant 0 : index
    %5 = vector.load %arg4[%c0_6, %c0_7] : memref<8x128xf32, #tpu.memory_space<vmem>>, vector<8x128xf32>
    tpu.vector_store %arg4[%c0_6, %c0_7], %4 {strides = array<i32>} : memref<8x128xf32, #tpu.memory_space<vmem>>, vector<8x128xf32>,
    return
  }
  func.func @transform_0(%arg0: i32) -> (i32, i32) {
    %c0_i32 = arith.constant 0 : i32
    %c0_i32_0 = arith.constant 0 : i32
    return %arg0, %c0_i32 : i32, i32
  }
  func.func @transform_1(%arg0: i32) -> (i32, i32) {
    %c0_i32 = arith.constant 0 : i32
    %c0_i32_0 = arith.constant 0 : i32
    %c0_i32_1 = arith.constant 0 : i32
    return %c0_i32, %c0_i32_0 : i32, i32
  }
  func.func @transform_2(%arg0: i32) -> (i32, i32) {
    %c0_i32 = arith.constant 0 : i32
    %c0_i32_0 = arith.constant 0 : i32
    %c0_i32_1 = arith.constant 0 : i32
    return %c0_i32, %c0_i32_0 : i32, i32
  }
  func.func @transform_3(%arg0: i32) -> (i32, i32) {
    %c0_i32 = arith.constant 0 : i32
    %c0_i32_0 = arith.constant 0 : i32
    return %arg0, %c0_i32 : i32, i32
  }
}

</mosaic_0001>

<llo_original>
// kernel: tpu_custom_call.1
$region0: #{tpu_custom_call.1}
  #allocation0 [shape = 'u32[]', space=smem, size = 0x4, offset = 0x4, fixed_abs, tag = 'smem constant byte address 0x4 - core index']
  #allocation1 [shape = 'u32[144,128]{1,0:T(1,128)}', space=vmem, size = 0x12000, scoped, tag = 'internal scratch']
  %s0 = inlined_call_operand.hbm [shape: f32[8,128], index: 0, kind: input, shape index: {}]
  %s1 = inlined_call_operand.hbm [shape: f32[128,128], index: 1, kind: input, shape index: {}]
  %s2 = inlined_call_operand.hbm [shape: f32[128,128], index: 2, kind: input, shape index: {}]
  %s3 = inlined_call_operand.hbm [shape: f32[8,128], index: 3, kind: output, shape index: {}]
  %s4 = sld [smem:[#allocation0]]
  $region34: #{tpu_custom_call.1} parent=0
    _
  %s6 = ssub.s32 1, %s4
  %s7 = scalar_select 0, %s6, %s4
  $region1: #{tpu_custom_call.1} parent=0
    #allocation2 [shape = 'u8[4096]{0}', space=vmem, size = 0x1000, scoped, tag = 'input window, operand 0, single buffered']
    #allocation3 [shape = 's32[1]{0}', space=sflag, size = 0x4, scoped, tag = 'scoped memory for tpu_custom_call.1']
    #allocation4 [shape = 's32[1]{0}', space=sflag, size = 0x4, scoped, tag = 'scoped memory for tpu_custom_call.1']
    #allocation5 [shape = 'u8[65536]{0}', space=vmem, size = 0x10000, scoped, tag = 'input window, operand 1, single buffered']
    #allocation6 [shape = 's32[1]{0}', space=sflag, size = 0x4, scoped, tag = 'scoped memory for tpu_custom_call.1']
    #allocation7 [shape = 'u8[65536]{0}', space=vmem, size = 0x10000, scoped, tag = 'input window, operand 2, single buffered']
    #allocation8 [shape = 'u8[4096]{0}', space=vmem, size = 0x1000, scoped, tag = 'output window, operand 0, single buffered']
    %8 = vsyncpa [#allocation3], 0
    %9 = vsyncpa [#allocation6], 0
    %10 = vsyncpa [#allocation4], 0
    // Predicated region
    $region2: #{tpu_custom_call.1} parent=1 // pred_check
      _
    $region3: #{tpu_custom_call.1} parent=1 // pred_check_branch
      %12 = sbr.rel (0) target = $region5
    $region4: #{tpu_custom_call.1} parent=1 // pred_region
      %s14 = ssub.s32 128, 128
      %15 = vsyncadd [#allocation3], %s14
      %s17 = sshll.u32 [#allocation2], 4
      %s18 = int_to_ptr.vmem [resolvable:$true] %s17
      %20 = dma.hbm_to_vmem [thread:$0]  %s0, 128, %s18, [#allocation3]
    $region5: #{tpu_custom_call.1} parent=1 // pred_fallthru
      _
    // Predicated region
    $region6: #{tpu_custom_call.1} parent=1 // pred_check
      _
    $region7: #{tpu_custom_call.1} parent=1 // pred_check_branch
      %22 = sbr.rel (0) target = $region9
    $region8: #{tpu_custom_call.1} parent=1 // pred_region
      %s24 = ssub.s32 2048, 2048
      %25 = vsyncadd [#allocation6], %s24
      %s26 = sshll.u32 [#allocation5], 4
      %s27 = int_to_ptr.vmem [resolvable:$true] %s26
      %32 = dma.hbm_to_vmem [thread:$0]  %s1, 2048, %s27, [#allocation6], 128, 128, 8
    $region9: #{tpu_custom_call.1} parent=1 // pred_fallthru
      _
    // Predicated region
    $region10: #{tpu_custom_call.1} parent=1 // pred_check
      _
    $region11: #{tpu_custom_call.1} parent=1 // pred_check_branch
      %34 = sbr.rel (0) target = $region13
    $region12: #{tpu_custom_call.1} parent=1 // pred_region
      %s36 = ssub.s32 2048, 2048
      %37 = vsyncadd [#allocation6], %s36
      %s38 = sshll.u32 [#allocation7], 4
      %s39 = int_to_ptr.vmem [resolvable:$true] %s38
      %44 = dma.hbm_to_vmem [thread:$0]  %s2, 2048, %s39, [#allocation6], 128, 128, 8
    $region13: #{tpu_custom_call.1} parent=1 // pred_fallthru
      _
    // Predicated region
    $region14: #{tpu_custom_call.1} parent=1 // pred_check
      _
    $region15: #{tpu_custom_call.1} parent=1 // pred_check_branch
      %46 = sbr.rel (0) target = $region17
    $region16: #{tpu_custom_call.1} parent=1 // pred_region
      %47 = dma.done [#allocation3], 128
    $region17: #{tpu_custom_call.1} parent=1 // pred_fallthru
      _
    // Predicated region
    $region18: #{tpu_custom_call.1} parent=1 // pred_check
      _
    $region19: #{tpu_custom_call.1} parent=1 // pred_check_branch
      %49 = sbr.rel (0) target = $region21
    $region20: #{tpu_custom_call.1} parent=1 // pred_region
      %50 = dma.done [#allocation6], 2048
    $region21: #{tpu_custom_call.1} parent=1 // pred_fallthru
      _
    // Predicated region
    $region22: #{tpu_custom_call.1} parent=1 // pred_check
      _
    $region23: #{tpu_custom_call.1} parent=1 // pred_check_branch
      %52 = sbr.rel (0) target = $region25
    $region24: #{tpu_custom_call.1} parent=1 // pred_region
      %53 = dma.done [#allocation6], 2048
    $region25: #{tpu_custom_call.1} parent=1 // pred_fallthru
      _
    %v54 = vld [vmem:[#allocation2] sm:$0xff]
    %v55 = vld [vmem:[#allocation5] sm:$0xff]
    %v56 = vld [vmem:[#allocation5 + $0x8] sm:$0xff]
    %v57 = vld [vmem:[#allocation5 + $0x10] sm:$0xff]
    %v58 = vld [vmem:[#allocation5 + $0x18] sm:$0xff]
    %v59 = vld [vmem:[#allocation5 + $0x20] sm:$0xff]
    %v60 = vld [vmem:[#allocation5 + $0x28] sm:$0xff]
    %v61 = vld [vmem:[#allocation5 + $0x30] sm:$0xff]
    %v62 = vld [vmem:[#allocation5 + $0x38] sm:$0xff]
    %v63 = vld [vmem:[#allocation5 + $0x40] sm:$0xff]
    %v64 = vld [vmem:[#allocation5 + $0x48] sm:$0xff]
    %v65 = vld [vmem:[#allocation5 + $0x50] sm:$0xff]
    %v66 = vld [vmem:[#allocation5 + $0x58] sm:$0xff]
    %v67 = vld [vmem:[#allocation5 + $0x60] sm:$0xff]
    %v68 = vld [vmem:[#allocation5 + $0x68] sm:$0xff]
    %v69 = vld [vmem:[#allocation5 + $0x70] sm:$0xff]
    %v70 = vld [vmem:[#allocation5 + $0x78] sm:$0xff]
    %71 = vmatprep.subr.mxu0 0.0
    %v72 = vand.u32 %v55, 4294901760
    %73 = vmatpush1.msra.mxu0 %v72
    %74 = vmatprep.subr.mxu0 0.0
    %v75 = vand.u32 %v56, 4294901760
    %76 = vmatpush1.msra.mxu0 %v75
    %77 = vmatprep.subr.mxu0 0.0
    %v78 = vand.u32 %v57, 4294901760
    %79 = vmatpush1.msra.mxu0 %v78
    %80 = vmatprep.subr.mxu0 0.0
    %v81 = vand.u32 %v58, 4294901760
    %82 = vmatpush1.msra.mxu0 %v81
    %83 = vmatprep.subr.mxu0 0.0
    %v84 = vand.u32 %v59, 4294901760
    %85 = vmatpush1.msra.mxu0 %v84
    %86 = vmatprep.subr.mxu0 0.0
    %v87 = vand.u32 %v60, 4294901760
    %88 = vmatpush1.msra.mxu0 %v87
    %89 = vmatprep.subr.mxu0 0.0
    %v90 = vand.u32 %v61, 4294901760
    %91 = vmatpush1.msra.mxu0 %v90
    %92 = vmatprep.subr.mxu0 0.0
    %v93 = vand.u32 %v62, 4294901760
    %94 = vmatpush1.msra.mxu0 %v93
    %95 = vmatprep.subr.mxu0 0.0
    %v96 = vand.u32 %v63, 4294901760
    %97 = vmatpush1.msra.mxu0 %v96
    %98 = vmatprep.subr.mxu0 0.0
    %v99 = vand.u32 %v64, 4294901760
    %100 = vmatpush1.msra.mxu0 %v99
    %101 = vmatprep.subr.mxu0 0.0
    %v102 = vand.u32 %v65, 4294901760
    %103 = vmatpush1.msra.mxu0 %v102
    %104 = vmatprep.subr.mxu0 0.0
    %v105 = vand.u32 %v66, 4294901760
    %106 = vmatpush1.msra.mxu0 %v105
    %107 = vmatprep.subr.mxu0 0.0
    %v108 = vand.u32 %v67, 4294901760
    %109 = vmatpush1.msra.mxu0 %v108
    %110 = vmatprep.subr.mxu0 0.0
    %v111 = vand.u32 %v68, 4294901760
    %112 = vmatpush1.msra.mxu0 %v111
    %113 = vmatprep.subr.mxu0 0.0
    %v114 = vand.u32 %v69, 4294901760
    %115 = vmatpush1.msra.mxu0 %v114
    %116 = vmatprep.subr.mxu0 0.0
    %v117 = vand.u32 %v70, 4294901760
    %118 = vmatpush1.msra.mxu0 %v117
    %119 = vmatprep.subr.mxu0 0.0
    %120 = vmatpush1.msra.mxu0 0.0
    %121 = vmatprep.subr.mxu0 0.0
    %122 = vmatpush1.msra.mxu0 0.0
    %123 = vmatprep.subr.mxu0 0.0
    %124 = vmatpush1.msra.mxu0 0.0
    %125 = vmatprep.subr.mxu0 0.0
    %126 = vmatpush1.msra.mxu0 0.0
    %127 = vmatprep.subr.mxu0 0.0
    %128 = vmatpush1.msra.mxu0 0.0
    %129 = vmatprep.subr.mxu0 0.0
    %130 = vmatpush1.msra.mxu0 0.0
    %131 = vmatprep.subr.mxu0 0.0
    %132 = vmatpush1.msra.mxu0 0.0
    %133 = vmatprep.subr.mxu0 0.0
    %134 = vmatpush1.msra.mxu0 0.0
    %135 = vmatprep.subr.mxu0 0.0
    %136 = vmatpush1.msra.mxu0 0.0
    %137 = vmatprep.subr.mxu0 0.0
    %138 = vmatpush1.msra.mxu0 0.0
    %139 = vmatprep.subr.mxu0 0.0
    %140 = vmatpush1.msra.mxu0 0.0
    %141 = vmatprep.subr.mxu0 0.0
    %142 = vmatpush1.msra.mxu0 0.0
    %143 = vmatprep.subr.mxu0 0.0
    %144 = vmatpush1.msra.mxu0 0.0
    %145 = vmatprep.subr.mxu0 0.0
    %146 = vmatpush1.msra.mxu0 0.0
    %147 = vmatprep.subr.mxu0 0.0
    %148 = vmatpush1.msra.mxu0 0.0
    %149 = vmatprep.subr.mxu0 0.0
    %150 = vmatpush1.msra.mxu0 0.0
    %151 = vmatprep.mubr.f32.mxu0 0.0
    %v152 = vand.u32 %v54, 4294901760
    %v153 = vsub.f32 %v54, %v152
    %v154 = vand.u32 %v153, 4294901760
    %v155 = vsub.f32 %v153, %v154
    %v156 = vand.u32 %v155, 4294901760
    %157 = vmatmul.mubr.f32.gmra.mrb[0].mxu0 %v156
    %v158 = vpop.f32.mrb[0].mxu0
    %v159 = vadd.f32 0.0, %v158
    %v160 = vpop.f32.mrb[0].mxu0
    %161 = vdwg.mxu0
    %162 = vmatprep.subr.mxu0 0.0
    %v163 = vand.u32 %v55, 4294901760
    %v164 = vsub.f32 %v55, %v163
    %v165 = vand.u32 %v164, 4294901760
    %v166 = vsub.f32 %v164, %v165
    %v167 = vand.u32 %v166, 4294901760
    %168 = vmatpush1.msra.mxu0 %v167
    %169 = vmatprep.subr.mxu0 0.0
    %v170 = vand.u32 %v56, 4294901760
    %v171 = vsub.f32 %v56, %v170
    %v172 = vand.u32 %v171, 4294901760
    %v173 = vsub.f32 %v171, %v172
    %v174 = vand.u32 %v173, 4294901760
    %175 = vmatpush1.msra.mxu0 %v174
    %176 = vmatprep.subr.mxu0 0.0
    %v177 = vand.u32 %v57, 4294901760
    %v178 = vsub.f32 %v57, %v177
    %v179 = vand.u32 %v178, 4294901760
    %v180 = vsub.f32 %v178, %v179
    %v181 = vand.u32 %v180, 4294901760
    %182 = vmatpush1.msra.mxu0 %v181
    %183 = vmatprep.subr.mxu0 0.0
    %v184 = vand.u32 %v58, 4294901760
    %v185 = vsub.f32 %v58, %v184
    %v186 = vand.u32 %v185, 4294901760
    %v187 = vsub.f32 %v185, %v186
    %v188 = vand.u32 %v187, 4294901760
    %189 = vmatpush1.msra.mxu0 %v188
    %190 = vmatprep.subr.mxu0 0.0
    %v191 = vand.u32 %v59, 4294901760
    %v192 = vsub.f32 %v59, %v191
    %v193 = vand.u32 %v192, 4294901760
    %v194 = vsub.f32 %v192, %v193
    %v195 = vand.u32 %v194, 4294901760
    %196 = vmatpush1.msra.mxu0 %v195
    %197 = vmatprep.subr.mxu0 0.0
    %v198 = vand.u32 %v60, 4294901760
    %v199 = vsub.f32 %v60, %v198
    %v200 = vand.u32 %v199, 4294901760
    %v201 = vsub.f32 %v199, %v200
    %v202 = vand.u32 %v201, 4294901760
    %203 = vmatpush1.msra.mxu0 %v202
    %204 = vmatprep.subr.mxu0 0.0
    %v205 = vand.u32 %v61, 4294901760
    %v206 = vsub.f32 %v61, %v205
    %v207 = vand.u32 %v206, 4294901760
    %v208 = vsub.f32 %v206, %v207
    %v209 = vand.u32 %v208, 4294901760
    %210 = vmatpush1.msra.mxu0 %v209
    %211 = vmatprep.subr.mxu0 0.0
    %v212 = vand.u32 %v62, 4294901760
    %v213 = vsub.f32 %v62, %v212
    %v214 = vand.u32 %v213, 4294901760
    %v215 = vsub.f32 %v213, %v214
    %v216 = vand.u32 %v215, 4294901760
    %217 = vmatpush1.msra.mxu0 %v216
    %218 = vmatprep.subr.mxu0 0.0
    %v219 = vand.u32 %v63, 4294901760
    %v220 = vsub.f32 %v63, %v219
    %v221 = vand.u32 %v220, 4294901760
    %v222 = vsub.f32 %v220, %v221
    %v223 = vand.u32 %v222, 4294901760
    %224 = vmatpush1.msra.mxu0 %v223
    %225 = vmatprep.subr.mxu0 0.0
    %v226 = vand.u32 %v64, 4294901760
    %v227 = vsub.f32 %v64, %v226
    %v228 = vand.u32 %v227, 4294901760
    %v229 = vsub.f32 %v227, %v228
    %v230 = vand.u32 %v229, 4294901760
    %231 = vmatpush1.msra.mxu0 %v230
    %232 = vmatprep.subr.mxu0 0.0
    %v233 = vand.u32 %v65, 4294901760
    %v234 = vsub.f32 %v65, %v233
    %v235 = vand.u32 %v234, 4294901760
    %v236 = vsub.f32 %v234, %v235
    %v237 = vand.u32 %v236, 4294901760
    %238 = vmatpush1.msra.mxu0 %v237
    %239 = vmatprep.subr.mxu0 0.0
    %v240 = vand.u32 %v66, 4294901760
    %v241 = vsub.f32 %v66, %v240
    %v242 = vand.u32 %v241, 4294901760
    %v243 = vsub.f32 %v241, %v242
    %v244 = vand.u32 %v243, 4294901760
    %245 = vmatpush1.msra.mxu0 %v244
    %246 = vmatprep.subr.mxu0 0.0
    %v247 = vand.u32 %v67, 4294901760
    %v248 = vsub.f32 %v67, %v247
    %v249 = vand.u32 %v248, 4294901760
    %v250 = vsub.f32 %v248, %v249
    %v251 = vand.u32 %v250, 4294901760
    %252 = vmatpush1.msra.mxu0 %v251
    %253 = vmatprep.subr.mxu0 0.0
    %v254 = vand.u32 %v68, 4294901760
    %v255 = vsub.f32 %v68, %v254
    %v256 = vand.u32 %v255, 4294901760
    %v257 = vsub.f32 %v255, %v256
    %v258 = vand.u32 %v257, 4294901760
    %259 = vmatpush1.msra.mxu0 %v258
    %260 = vmatprep.subr.mxu0 0.0
    %v261 = vand.u32 %v69, 4294901760
    %v262 = vsub.f32 %v69, %v261
    %v263 = vand.u32 %v262, 4294901760
    %v264 = vsub.f32 %v262, %v263
    %v265 = vand.u32 %v264, 4294901760
    %266 = vmatpush1.msra.mxu0 %v265
    %267 = vmatprep.subr.mxu0 0.0
    %v268 = vand.u32 %v70, 4294901760
    %v269 = vsub.f32 %v70, %v268
    %v270 = vand.u32 %v269, 4294901760
    %v271 = vsub.f32 %v269, %v270
    %v272 = vand.u32 %v271, 4294901760
    %273 = vmatpush1.msra.mxu0 %v272
    %274 = vmatprep.subr.mxu0 0.0
    %275 = vmatpush1.msra.mxu0 0.0
    %276 = vmatprep.subr.mxu0 0.0
    %277 = vmatpush1.msra.mxu0 0.0
    %278 = vmatprep.subr.mxu0 0.0
    %279 = vmatpush1.msra.mxu0 0.0
    %280 = vmatprep.subr.mxu0 0.0
    %281 = vmatpush1.msra.mxu0 0.0
    %282 = vmatprep.subr.mxu0 0.0
    %283 = vmatpush1.msra.mxu0 0.0
    %284 = vmatprep.subr.mxu0 0.0
    %285 = vmatpush1.msra.mxu0 0.0
    %286 = vmatprep.subr.mxu0 0.0
    %287 = vmatpush1.msra.mxu0 0.0
    %288 = vmatprep.subr.mxu0 0.0
    %289 = vmatpush1.msra.mxu0 0.0
    %290 = vmatprep.subr.mxu0 0.0
    %291 = vmatpush1.msra.mxu0 0.0
    %292 = vmatprep.subr.mxu0 0.0
    %293 = vmatpush1.msra.mxu0 0.0
    %294 = vmatprep.subr.mxu0 0.0
    %295 = vmatpush1.msra.mxu0 0.0
    %296 = vmatprep.subr.mxu0 0.0
    %297 = vmatpush1.msra.mxu0 0.0
    %298 = vmatprep.subr.mxu0 0.0
    %299 = vmatpush1.msra.mxu0 0.0
    %300 = vmatprep.subr.mxu0 0.0
    %301 = vmatpush1.msra.mxu0 0.0
    %302 = vmatprep.subr.mxu0 0.0
    %303 = vmatpush1.msra.mxu0 0.0
    %304 = vmatprep.subr.mxu0 0.0
    %305 = vmatpush1.msra.mxu0 0.0
    %306 = vmatprep.mubr.f32.mxu0 0.0
    %v307 = vand.u32 %v54, 4294901760
    %308 = vmatmul.mubr.f32.gmra.mrb[0].mxu0 %v307
    %v309 = vpop.f32.mrb[0].mxu0
    %v310 = vadd.f32 %v159, %v309
    %v311 = vpop.f32.mrb[0].mxu0
    %312 = vdwg.mxu0
    %313 = vmatprep.subr.mxu0 0.0
    %v314 = vand.u32 %v55, 4294901760
    %v315 = vsub.f32 %v55, %v314
    %316 = vmatpush1.msra.mxu0 %v315
    %317 = vmatprep.subr.mxu0 0.0
    %v318 = vand.u32 %v56, 4294901760
    %v319 = vsub.f32 %v56, %v318
    %320 = vmatpush1.msra.mxu0 %v319
    %321 = vmatprep.subr.mxu0 0.0
    %v322 = vand.u32 %v57, 4294901760
    %v323 = vsub.f32 %v57, %v322
    %324 = vmatpush1.msra.mxu0 %v323
    %325 = vmatprep.subr.mxu0 0.0
    %v326 = vand.u32 %v58, 4294901760
    %v327 = vsub.f32 %v58, %v326
    %328 = vmatpush1.msra.mxu0 %v327
    %329 = vmatprep.subr.mxu0 0.0
    %v330 = vand.u32 %v59, 4294901760
    %v331 = vsub.f32 %v59, %v330
    %332 = vmatpush1.msra.mxu0 %v331
    %333 = vmatprep.subr.mxu0 0.0
    %v334 = vand.u32 %v60, 4294901760
    %v335 = vsub.f32 %v60, %v334
    %336 = vmatpush1.msra.mxu0 %v335
    %337 = vmatprep.subr.mxu0 0.0
    %v338 = vand.u32 %v61, 4294901760
    %v339 = vsub.f32 %v61, %v338
    %340 = vmatpush1.msra.mxu0 %v339
    %341 = vmatprep.subr.mxu0 0.0
    %v342 = vand.u32 %v62, 4294901760
    %v343 = vsub.f32 %v62, %v342
    %344 = vmatpush1.msra.mxu0 %v343
    %345 = vmatprep.subr.mxu0 0.0
    %v346 = vand.u32 %v63, 4294901760
    %v347 = vsub.f32 %v63, %v346
    %348 = vmatpush1.msra.mxu0 %v347
    %349 = vmatprep.subr.mxu0 0.0
    %v350 = vand.u32 %v64, 4294901760
    %v351 = vsub.f32 %v64, %v350
    %352 = vmatpush1.msra.mxu0 %v351
    %353 = vmatprep.subr.mxu0 0.0
    %v354 = vand.u32 %v65, 4294901760
    %v355 = vsub.f32 %v65, %v354
    %356 = vmatpush1.msra.mxu0 %v355
    %357 = vmatprep.subr.mxu0 0.0
    %v358 = vand.u32 %v66, 4294901760
    %v359 = vsub.f32 %v66, %v358
    %360 = vmatpush1.msra.mxu0 %v359
    %361 = vmatprep.subr.mxu0 0.0
    %v362 = vand.u32 %v67, 4294901760
    %v363 = vsub.f32 %v67, %v362
    %364 = vmatpush1.msra.mxu0 %v363
    %365 = vmatprep.subr.mxu0 0.0
    %v366 = vand.u32 %v68, 4294901760
    %v367 = vsub.f32 %v68, %v366
    %368 = vmatpush1.msra.mxu0 %v367
    %369 = vmatprep.subr.mxu0 0.0
    %v370 = vand.u32 %v69, 4294901760
    %v371 = vsub.f32 %v69, %v370
    %372 = vmatpush1.msra.mxu0 %v371
    %373 = vmatprep.subr.mxu0 0.0
    %v374 = vand.u32 %v70, 4294901760
    %v375 = vsub.f32 %v70, %v374
    %376 = vmatpush1.msra.mxu0 %v375
    %377 = vmatprep.subr.mxu0 0.0
    %378 = vmatpush1.msra.mxu0 0.0
    %379 = vmatprep.subr.mxu0 0.0
    %380 = vmatpush1.msra.mxu0 0.0
    %381 = vmatprep.subr.mxu0 0.0
    %382 = vmatpush1.msra.mxu0 0.0
    %383 = vmatprep.subr.mxu0 0.0
    %384 = vmatpush1.msra.mxu0 0.0
    %385 = vmatprep.subr.mxu0 0.0
    %386 = vmatpush1.msra.mxu0 0.0
    %387 = vmatprep.subr.mxu0 0.0
    %388 = vmatpush1.msra.mxu0 0.0
    %389 = vmatprep.subr.mxu0 0.0
    %390 = vmatpush1.msra.mxu0 0.0
    %391 = vmatprep.subr.mxu0 0.0
    %392 = vmatpush1.msra.mxu0 0.0
    %393 = vmatprep.subr.mxu0 0.0
    %394 = vmatpush1.msra.mxu0 0.0
    %395 = vmatprep.subr.mxu0 0.0
    %396 = vmatpush1.msra.mxu0 0.0
    %397 = vmatprep.subr.mxu0 0.0
    %398 = vmatpush1.msra.mxu0 0.0
    %399 = vmatprep.subr.mxu0 0.0
    %400 = vmatpush1.msra.mxu0 0.0
    %401 = vmatprep.subr.mxu0 0.0
    %402 = vmatpush1.msra.mxu0 0.0
    %403 = vmatprep.subr.mxu0 0.0
    %404 = vmatpush1.msra.mxu0 0.0
    %405 = vmatprep.subr.mxu0 0.0
    %406 = vmatpush1.msra.mxu0 0.0
    %407 = vmatprep.subr.mxu0 0.0
    %408 = vmatpush1.msra.mxu0 0.0
    %409 = vmatprep.mubr.f32.mxu0 0.0
    %v410 = vand.u32 %v54, 4294901760
    %v411 = vsub.f32 %v54, %v410
    %412 = vmatmul.mubr.f32.gmra.mrb[0].mxu0 %v411
    %v413 = vpop.f32.mrb[0].mxu0
    %v414 = vadd.f32 %v310, %v413
    %v415 = vpop.f32.mrb[0].mxu0
    %416 = vdwg.mxu0
    %417 = vmatprep.subr.mxu0 0.0
    %v418 = vand.u32 %v55, 4294901760
    %419 = vmatpush1.msra.mxu0 %v418
    %420 = vmatprep.subr.mxu0 0.0
    %v421 = vand.u32 %v56, 4294901760
    %422 = vmatpush1.msra.mxu0 %v421
    %423 = vmatprep.subr.mxu0 0.0
    %v424 = vand.u32 %v57, 4294901760
    %425 = vmatpush1.msra.mxu0 %v424
    %426 = vmatprep.subr.mxu0 0.0
    %v427 = vand.u32 %v58, 4294901760
    %428 = vmatpush1.msra.mxu0 %v427
    %429 = vmatprep.subr.mxu0 0.0
    %v430 = vand.u32 %v59, 4294901760
    %431 = vmatpush1.msra.mxu0 %v430
    %432 = vmatprep.subr.mxu0 0.0
    %v433 = vand.u32 %v60, 4294901760
    %434 = vmatpush1.msra.mxu0 %v433
    %435 = vmatprep.subr.mxu0 0.0
    %v436 = vand.u32 %v61, 4294901760
    %437 = vmatpush1.msra.mxu0 %v436
    %438 = vmatprep.subr.mxu0 0.0
    %v439 = vand.u32 %v62, 4294901760
    %440 = vmatpush1.msra.mxu0 %v439
    %441 = vmatprep.subr.mxu0 0.0
    %v442 = vand.u32 %v63, 4294901760
    %443 = vmatpush1.msra.mxu0 %v442
    %444 = vmatprep.subr.mxu0 0.0
    %v445 = vand.u32 %v64, 4294901760
    %446 = vmatpush1.msra.mxu0 %v445
    %447 = vmatprep.subr.mxu0 0.0
    %v448 = vand.u32 %v65, 4294901760
    %449 = vmatpush1.msra.mxu0 %v448
    %450 = vmatprep.subr.mxu0 0.0
    %v451 = vand.u32 %v66, 4294901760
    %452 = vmatpush1.msra.mxu0 %v451
    %453 = vmatprep.subr.mxu0 0.0
    %v454 = vand.u32 %v67, 4294901760
    %455 = vmatpush1.msra.mxu0 %v454
    %456 = vmatprep.subr.mxu0 0.0
    %v457 = vand.u32 %v68, 4294901760
    %458 = vmatpush1.msra.mxu0 %v457
    %459 = vmatprep.subr.mxu0 0.0
    %v460 = vand.u32 %v69, 4294901760
    %461 = vmatpush1.msra.mxu0 %v460
    %462 = vmatprep.subr.mxu0 0.0
    %v463 = vand.u32 %v70, 4294901760
    %464 = vmatpush1.msra.mxu0 %v463
    %465 = vmatprep.subr.mxu0 0.0
    %466 = vmatpush1.msra.mxu0 0.0
    %467 = vmatprep.subr.mxu0 0.0
    %468 = vmatpush1.msra.mxu0 0.0
    %469 = vmatprep.subr.mxu0 0.0
    %470 = vmatpush1.msra.mxu0 0.0
    %471 = vmatprep.subr.mxu0 0.0
    %472 = vmatpush1.msra.mxu0 0.0
    %473 = vmatprep.subr.mxu0 0.0
    %474 = vmatpush1.msra.mxu0 0.0
    %475 = vmatprep.subr.mxu0 0.0
    %476 = vmatpush1.msra.mxu0 0.0
    %477 = vmatprep.subr.mxu0 0.0
    %478 = vmatpush1.msra.mxu0 0.0
    %479 = vmatprep.subr.mxu0 0.0
    %480 = vmatpush1.msra.mxu0 0.0
    %481 = vmatprep.subr.mxu0 0.0
    %482 = vmatpush1.msra.mxu0 0.0
    %483 = vmatprep.subr.mxu0 0.0
    %484 = vmatpush1.msra.mxu0 0.0
    %485 = vmatprep.subr.mxu0 0.0
    %486 = vmatpush1.msra.mxu0 0.0
    %487 = vmatprep.subr.mxu0 0.0
    %488 = vmatpush1.msra.mxu0 0.0
    %489 = vmatprep.subr.mxu0 0.0
    %490 = vmatpush1.msra.mxu0 0.0
    %491 = vmatprep.subr.mxu0 0.0
    %492 = vmatpush1.msra.mxu0 0.0
    %493 = vmatprep.subr.mxu0 0.0
    %494 = vmatpush1.msra.mxu0 0.0
    %495 = vmatprep.subr.mxu0 0.0
    %496 = vmatpush1.msra.mxu0 0.0
    %497 = vmatprep.mubr.f32.mxu0 0.0
    %v498 = vand.u32 %v54, 4294901760
    %v499 = vsub.f32 %v54, %v498
    %v500 = vand.u32 %v499, 4294901760
    %501 = vmatmul.mubr.f32.gmra.mrb[0].mxu0 %v500
    %v502 = vpop.f32.mrb[0].mxu0
    %v503 = vadd.f32 %v414, %v502
    %v504 = vpop.f32.mrb[0].mxu0
    %505 = vdwg.mxu0
    %506 = vmatprep.subr.mxu0 0.0
    %v507 = vand.u32 %v55, 4294901760
    %v508 = vsub.f32 %v55, %v507
    %v509 = vand.u32 %v508, 4294901760
    %510 = vmatpush1.msra.mxu0 %v509
    %511 = vmatprep.subr.mxu0 0.0
    %v512 = vand.u32 %v56, 4294901760
    %v513 = vsub.f32 %v56, %v512
    %v514 = vand.u32 %v513, 4294901760
    %515 = vmatpush1.msra.mxu0 %v514
    %516 = vmatprep.subr.mxu0 0.0
    %v517 = vand.u32 %v57, 4294901760
    %v518 = vsub.f32 %v57, %v517
    %v519 = vand.u32 %v518, 4294901760
    %520 = vmatpush1.msra.mxu0 %v519
    %521 = vmatprep.subr.mxu0 0.0
    %v522 = vand.u32 %v58, 4294901760
    %v523 = vsub.f32 %v58, %v522
    %v524 = vand.u32 %v523, 4294901760
    %525 = vmatpush1.msra.mxu0 %v524
    %526 = vmatprep.subr.mxu0 0.0
    %v527 = vand.u32 %v59, 4294901760
    %v528 = vsub.f32 %v59, %v527
    %v529 = vand.u32 %v528, 4294901760
    %530 = vmatpush1.msra.mxu0 %v529
    %531 = vmatprep.subr.mxu0 0.0
    %v532 = vand.u32 %v60, 4294901760
    %v533 = vsub.f32 %v60, %v532
    %v534 = vand.u32 %v533, 4294901760
    %535 = vmatpush1.msra.mxu0 %v534
    %536 = vmatprep.subr.mxu0 0.0
    %v537 = vand.u32 %v61, 4294901760
    %v538 = vsub.f32 %v61, %v537
    %v539 = vand.u32 %v538, 4294901760
    %540 = vmatpush1.msra.mxu0 %v539
    %541 = vmatprep.subr.mxu0 0.0
    %v542 = vand.u32 %v62, 4294901760
    %v543 = vsub.f32 %v62, %v542
    %v544 = vand.u32 %v543, 4294901760
    %545 = vmatpush1.msra.mxu0 %v544
    %546 = vmatprep.subr.mxu0 0.0
    %v547 = vand.u32 %v63, 4294901760
    %v548 = vsub.f32 %v63, %v547
    %v549 = vand.u32 %v548, 4294901760
    %550 = vmatpush1.msra.mxu0 %v549
    %551 = vmatprep.subr.mxu0 0.0
    %v552 = vand.u32 %v64, 4294901760
    %v553 = vsub.f32 %v64, %v552
    %v554 = vand.u32 %v553, 4294901760
    %555 = vmatpush1.msra.mxu0 %v554
    %556 = vmatprep.subr.mxu0 0.0
    %v557 = vand.u32 %v65, 4294901760
    %v558 = vsub.f32 %v65, %v557
    %v559 = vand.u32 %v558, 4294901760
    %560 = vmatpush1.msra.mxu0 %v559
    %561 = vmatprep.subr.mxu0 0.0
    %v562 = vand.u32 %v66, 4294901760
    %v563 = vsub.f32 %v66, %v562
    %v564 = vand.u32 %v563, 4294901760
    %565 = vmatpush1.msra.mxu0 %v564
    %566 = vmatprep.subr.mxu0 0.0
    %v567 = vand.u32 %v67, 4294901760
    %v568 = vsub.f32 %v67, %v567
    %v569 = vand.u32 %v568, 4294901760
    %570 = vmatpush1.msra.mxu0 %v569
    %571 = vmatprep.subr.mxu0 0.0
    %v572 = vand.u32 %v68, 4294901760
    %v573 = vsub.f32 %v68, %v572
    %v574 = vand.u32 %v573, 4294901760
    %575 = vmatpush1.msra.mxu0 %v574
    %576 = vmatprep.subr.mxu0 0.0
    %v577 = vand.u32 %v69, 4294901760
    %v578 = vsub.f32 %v69, %v577
    %v579 = vand.u32 %v578, 4294901760
    %580 = vmatpush1.msra.mxu0 %v579
    %581 = vmatprep.subr.mxu0 0.0
    %v582 = vand.u32 %v70, 4294901760
    %v583 = vsub.f32 %v70, %v582
    %v584 = vand.u32 %v583, 4294901760
    %585 = vmatpush1.msra.mxu0 %v584
    %586 = vmatprep.subr.mxu0 0.0
    %587 = vmatpush1.msra.mxu0 0.0
    %588 = vmatprep.subr.mxu0 0.0
    %589 = vmatpush1.msra.mxu0 0.0
    %590 = vmatprep.subr.mxu0 0.0
    %591 = vmatpush1.msra.mxu0 0.0
    %592 = vmatprep.subr.mxu0 0.0
    %593 = vmatpush1.msra.mxu0 0.0
    %594 = vmatprep.subr.mxu0 0.0
    %595 = vmatpush1.msra.mxu0 0.0
    %596 = vmatprep.subr.mxu0 0.0
    %597 = vmatpush1.msra.mxu0 0.0
    %598 = vmatprep.subr.mxu0 0.0
    %599 = vmatpush1.msra.mxu0 0.0
    %600 = vmatprep.subr.mxu0 0.0
    %601 = vmatpush1.msra.mxu0 0.0
    %602 = vmatprep.subr.mxu0 0.0
    %603 = vmatpush1.msra.mxu0 0.0
    %604 = vmatprep.subr.mxu0 0.0
    %605 = vmatpush1.msra.mxu0 0.0
    %606 = vmatprep.subr.mxu0 0.0
    %607 = vmatpush1.msra.mxu0 0.0
    %608 = vmatprep.subr.mxu0 0.0
    %609 = vmatpush1.msra.mxu0 0.0
    %610 = vmatprep.subr.mxu0 0.0
    %611 = vmatpush1.msra.mxu0 0.0
    %612 = vmatprep.subr.mxu0 0.0
    %613 = vmatpush1.msra.mxu0 0.0
    %614 = vmatprep.subr.mxu0 0.0
    %615 = vmatpush1.msra.mxu0 0.0
    %616 = vmatprep.subr.mxu0 0.0
    %617 = vmatpush1.msra.mxu0 0.0
    %618 = vmatprep.mubr.f32.mxu0 0.0
    %v619 = vand.u32 %v54, 4294901760
    %620 = vmatmul.mubr.f32.gmra.mrb[0].mxu0 %v619
    %v621 = vpop.f32.mrb[0].mxu0
    %v622 = vadd.f32 %v503, %v621
    %v623 = vpop.f32.mrb[0].mxu0
    %624 = vdwg.mxu0
    %625 = vmatprep.subr.mxu0 0.0
    %v626 = vand.u32 %v55, 4294901760
    %627 = vmatpush1.msra.mxu0 %v626
    %628 = vmatprep.subr.mxu0 0.0
    %v629 = vand.u32 %v56, 4294901760
    %630 = vmatpush1.msra.mxu0 %v629
    %631 = vmatprep.subr.mxu0 0.0
    %v632 = vand.u32 %v57, 4294901760
    %633 = vmatpush1.msra.mxu0 %v632
    %634 = vmatprep.subr.mxu0 0.0
    %v635 = vand.u32 %v58, 4294901760
    %636 = vmatpush1.msra.mxu0 %v635
    %637 = vmatprep.subr.mxu0 0.0
    %v638 = vand.u32 %v59, 4294901760
    %639 = vmatpush1.msra.mxu0 %v638
    %640 = vmatprep.subr.mxu0 0.0
    %v641 = vand.u32 %v60, 4294901760
    %642 = vmatpush1.msra.mxu0 %v641
    %643 = vmatprep.subr.mxu0 0.0
    %v644 = vand.u32 %v61, 4294901760
    %645 = vmatpush1.msra.mxu0 %v644
    %646 = vmatprep.subr.mxu0 0.0
    %v647 = vand.u32 %v62, 4294901760
    %648 = vmatpush1.msra.mxu0 %v647
    %649 = vmatprep.subr.mxu0 0.0
    %v650 = vand.u32 %v63, 4294901760
    %651 = vmatpush1.msra.mxu0 %v650
    %652 = vmatprep.subr.mxu0 0.0
    %v653 = vand.u32 %v64, 4294901760
    %654 = vmatpush1.msra.mxu0 %v653
    %655 = vmatprep.subr.mxu0 0.0
    %v656 = vand.u32 %v65, 4294901760
    %657 = vmatpush1.msra.mxu0 %v656
    %658 = vmatprep.subr.mxu0 0.0
    %v659 = vand.u32 %v66, 4294901760
    %660 = vmatpush1.msra.mxu0 %v659
    %661 = vmatprep.subr.mxu0 0.0
    %v662 = vand.u32 %v67, 4294901760
    %663 = vmatpush1.msra.mxu0 %v662
    %664 = vmatprep.subr.mxu0 0.0
    %v665 = vand.u32 %v68, 4294901760
    %666 = vmatpush1.msra.mxu0 %v665
    %667 = vmatprep.subr.mxu0 0.0
    %v668 = vand.u32 %v69, 4294901760
    %669 = vmatpush1.msra.mxu0 %v668
    %670 = vmatprep.subr.mxu0 0.0
    %v671 = vand.u32 %v70, 4294901760
    %672 = vmatpush1.msra.mxu0 %v671
    %673 = vmatprep.subr.mxu0 0.0
    %674 = vmatpush1.msra.mxu0 0.0
    %675 = vmatprep.subr.mxu0 0.0
    %676 = vmatpush1.msra.mxu0 0.0
    %677 = vmatprep.subr.mxu0 0.0
    %678 = vmatpush1.msra.mxu0 0.0
    %679 = vmatprep.subr.mxu0 0.0
    %680 = vmatpush1.msra.mxu0 0.0
    %681 = vmatprep.subr.mxu0 0.0
    %682 = vmatpush1.msra.mxu0 0.0
    %683 = vmatprep.subr.mxu0 0.0
    %684 = vmatpush1.msra.mxu0 0.0
    %685 = vmatprep.subr.mxu0 0.0
    %686 = vmatpush1.msra.mxu0 0.0
    %687 = vmatprep.subr.mxu0 0.0
    %688 = vmatpush1.msra.mxu0 0.0
    %689 = vmatprep.subr.mxu0 0.0
    %690 = vmatpush1.msra.mxu0 0.0
    %691 = vmatprep.subr.mxu0 0.0
    %692 = vmatpush1.msra.mxu0 0.0
    %693 = vmatprep.subr.mxu0 0.0
    %694 = vmatpush1.msra.mxu0 0.0
    %695 = vmatprep.subr.mxu0 0.0
    %696 = vmatpush1.msra.mxu0 0.0
    %697 = vmatprep.subr.mxu0 0.0
    %698 = vmatpush1.msra.mxu0 0.0
    %699 = vmatprep.subr.mxu0 0.0
    %700 = vmatpush1.msra.mxu0 0.0
    %701 = vmatprep.subr.mxu0 0.0
    %702 = vmatpush1.msra.mxu0 0.0
    %703 = vmatprep.subr.mxu0 0.0
    %704 = vmatpush1.msra.mxu0 0.0
    %705 = vmatprep.mubr.f32.mxu0 0.0
    %v706 = vand.u32 %v54, 4294901760
    %707 = vmatmul.mubr.f32.gmra.mrb[0].mxu0 %v706
    %v708 = vpop.f32.mrb[0].mxu0
    %v709 = vadd.f32 %v622, %v708
    %v710 = vpop.f32.mrb[0].mxu0
    %711 = vdwg.mxu0
    %v712 = vld [vmem:[#allocation7] sm:$0xff]
    %v713 = vld [vmem:[#allocation7 + $0x8] sm:$0xff]
    %v714 = vld [vmem:[#allocation7 + $0x10] sm:$0xff]
    %v715 = vld [vmem:[#allocation7 + $0x18] sm:$0xff]
    %v716 = vld [vmem:[#allocation7 + $0x20] sm:$0xff]
    %v717 = vld [vmem:[#allocation7 + $0x28] sm:$0xff]
    %v718 = vld [vmem:[#allocation7 + $0x30] sm:$0xff]
    %v719 = vld [vmem:[#allocation7 + $0x38] sm:$0xff]
    %v720 = vld [vmem:[#allocation7 + $0x40] sm:$0xff]
    %v721 = vld [vmem:[#allocation7 + $0x48] sm:$0xff]
    %v722 = vld [vmem:[#allocation7 + $0x50] sm:$0xff]
    %v723 = vld [vmem:[#allocation7 + $0x58] sm:$0xff]
    %v724 = vld [vmem:[#allocation7 + $0x60] sm:$0xff]
    %v725 = vld [vmem:[#allocation7 + $0x68] sm:$0xff]
    %v726 = vld [vmem:[#allocation7 + $0x70] sm:$0xff]
    %v727 = vld [vmem:[#allocation7 + $0x78] sm:$0xff]
    %728 = vmatprep.subr.mxu0 0.0
    %v729 = vand.u32 %v712, 4294901760
    %730 = vmatpush1.msra.mxu0 %v729
    %731 = vmatprep.subr.mxu0 0.0
    %v732 = vand.u32 %v713, 4294901760
    %733 = vmatpush1.msra.mxu0 %v732
    %734 = vmatprep.subr.mxu0 0.0
    %v735 = vand.u32 %v714, 4294901760
    %736 = vmatpush1.msra.mxu0 %v735
    %737 = vmatprep.subr.mxu0 0.0
    %v738 = vand.u32 %v715, 4294901760
    %739 = vmatpush1.msra.mxu0 %v738
    %740 = vmatprep.subr.mxu0 0.0
    %v741 = vand.u32 %v716, 4294901760
    %742 = vmatpush1.msra.mxu0 %v741
    %743 = vmatprep.subr.mxu0 0.0
    %v744 = vand.u32 %v717, 4294901760
    %745 = vmatpush1.msra.mxu0 %v744
    %746 = vmatprep.subr.mxu0 0.0
    %v747 = vand.u32 %v718, 4294901760
    %748 = vmatpush1.msra.mxu0 %v747
    %749 = vmatprep.subr.mxu0 0.0
    %v750 = vand.u32 %v719, 4294901760
    %751 = vmatpush1.msra.mxu0 %v750
    %752 = vmatprep.subr.mxu0 0.0
    %v753 = vand.u32 %v720, 4294901760
    %754 = vmatpush1.msra.mxu0 %v753
    %755 = vmatprep.subr.mxu0 0.0
    %v756 = vand.u32 %v721, 4294901760
    %757 = vmatpush1.msra.mxu0 %v756
    %758 = vmatprep.subr.mxu0 0.0
    %v759 = vand.u32 %v722, 4294901760
    %760 = vmatpush1.msra.mxu0 %v759
    %761 = vmatprep.subr.mxu0 0.0
    %v762 = vand.u32 %v723, 4294901760
    %763 = vmatpush1.msra.mxu0 %v762
    %764 = vmatprep.subr.mxu0 0.0
    %v765 = vand.u32 %v724, 4294901760
    %766 = vmatpush1.msra.mxu0 %v765
    %767 = vmatprep.subr.mxu0 0.0
    %v768 = vand.u32 %v725, 4294901760
    %769 = vmatpush1.msra.mxu0 %v768
    %770 = vmatprep.subr.mxu0 0.0
    %v771 = vand.u32 %v726, 4294901760
    %772 = vmatpush1.msra.mxu0 %v771
    %773 = vmatprep.subr.mxu0 0.0
    %v774 = vand.u32 %v727, 4294901760
    %775 = vmatpush1.msra.mxu0 %v774
    %776 = vmatprep.subr.mxu0 0.0
    %777 = vmatpush1.msra.mxu0 0.0
    %778 = vmatprep.subr.mxu0 0.0
    %779 = vmatpush1.msra.mxu0 0.0
    %780 = vmatprep.subr.mxu0 0.0
    %781 = vmatpush1.msra.mxu0 0.0
    %782 = vmatprep.subr.mxu0 0.0
    %783 = vmatpush1.msra.mxu0 0.0
    %784 = vmatprep.subr.mxu0 0.0
    %785 = vmatpush1.msra.mxu0 0.0
    %786 = vmatprep.subr.mxu0 0.0
    %787 = vmatpush1.msra.mxu0 0.0
    %788 = vmatprep.subr.mxu0 0.0
    %789 = vmatpush1.msra.mxu0 0.0
    %790 = vmatprep.subr.mxu0 0.0
    %791 = vmatpush1.msra.mxu0 0.0
    %792 = vmatprep.subr.mxu0 0.0
    %793 = vmatpush1.msra.mxu0 0.0
    %794 = vmatprep.subr.mxu0 0.0
    %795 = vmatpush1.msra.mxu0 0.0
    %796 = vmatprep.subr.mxu0 0.0
    %797 = vmatpush1.msra.mxu0 0.0
    %798 = vmatprep.subr.mxu0 0.0
    %799 = vmatpush1.msra.mxu0 0.0
    %800 = vmatprep.subr.mxu0 0.0
    %801 = vmatpush1.msra.mxu0 0.0
    %802 = vmatprep.subr.mxu0 0.0
    %803 = vmatpush1.msra.mxu0 0.0
    %804 = vmatprep.subr.mxu0 0.0
    %805 = vmatpush1.msra.mxu0 0.0
    %806 = vmatprep.subr.mxu0 0.0
    %807 = vmatpush1.msra.mxu0 0.0
    %808 = vmatprep.mubr.f32.mxu0 0.0
    %v809 = vand.u32 %v709, 4294901760
    %v810 = vsub.f32 %v709, %v809
    %v811 = vand.u32 %v810, 4294901760
    %v812 = vsub.f32 %v810, %v811
    %v813 = vand.u32 %v812, 4294901760
    %814 = vmatmul.mubr.f32.gmra.mrb[0].mxu0 %v813
    %v815 = vpop.f32.mrb[0].mxu0
    %v816 = vadd.f32 0.0, %v815
    %v817 = vpop.f32.mrb[0].mxu0
    %818 = vdwg.mxu0
    %819 = vmatprep.subr.mxu0 0.0
    %v820 = vand.u32 %v712, 4294901760
    %v821 = vsub.f32 %v712, %v820
    %v822 = vand.u32 %v821, 4294901760
    %v823 = vsub.f32 %v821, %v822
    %v824 = vand.u32 %v823, 4294901760
    %825 = vmatpush1.msra.mxu0 %v824
    %826 = vmatprep.subr.mxu0 0.0
    %v827 = vand.u32 %v713, 4294901760
    %v828 = vsub.f32 %v713, %v827
    %v829 = vand.u32 %v828, 4294901760
    %v830 = vsub.f32 %v828, %v829
    %v831 = vand.u32 %v830, 4294901760
    %832 = vmatpush1.msra.mxu0 %v831
    %833 = vmatprep.subr.mxu0 0.0
    %v834 = vand.u32 %v714, 4294901760
    %v835 = vsub.f32 %v714, %v834
    %v836 = vand.u32 %v835, 4294901760
    %v837 = vsub.f32 %v835, %v836
    %v838 = vand.u32 %v837, 4294901760
    %839 = vmatpush1.msra.mxu0 %v838
    %840 = vmatprep.subr.mxu0 0.0
    %v841 = vand.u32 %v715, 4294901760
    %v842 = vsub.f32 %v715, %v841
    %v843 = vand.u32 %v842, 4294901760
    %v844 = vsub.f32 %v842, %v843
    %v845 = vand.u32 %v844, 4294901760
    %846 = vmatpush1.msra.mxu0 %v845
    %847 = vmatprep.subr.mxu0 0.0
    %v848 = vand.u32 %v716, 4294901760
    %v849 = vsub.f32 %v716, %v848
    %v850 = vand.u32 %v849, 4294901760
    %v851 = vsub.f32 %v849, %v850
    %v852 = vand.u32 %v851, 4294901760
    %853 = vmatpush1.msra.mxu0 %v852
    %854 = vmatprep.subr.mxu0 0.0
    %v855 = vand.u32 %v717, 4294901760
    %v856 = vsub.f32 %v717, %v855
    %v857 = vand.u32 %v856, 4294901760
    %v858 = vsub.f32 %v856, %v857
    %v859 = vand.u32 %v858, 4294901760
    %860 = vmatpush1.msra.mxu0 %v859
    %861 = vmatprep.subr.mxu0 0.0
    %v862 = vand.u32 %v718, 4294901760
    %v863 = vsub.f32 %v718, %v862
    %v864 = vand.u32 %v863, 4294901760
    %v865 = vsub.f32 %v863, %v864
    %v866 = vand.u32 %v865, 4294901760
    %867 = vmatpush1.msra.mxu0 %v866
    %868 = vmatprep.subr.mxu0 0.0
    %v869 = vand.u32 %v719, 4294901760
    %v870 = vsub.f32 %v719, %v869
    %v871 = vand.u32 %v870, 4294901760
    %v872 = vsub.f32 %v870, %v871
    %v873 = vand.u32 %v872, 4294901760
    %874 = vmatpush1.msra.mxu0 %v873
    %875 = vmatprep.subr.mxu0 0.0
    %v876 = vand.u32 %v720, 4294901760
    %v877 = vsub.f32 %v720, %v876
    %v878 = vand.u32 %v877, 4294901760
    %v879 = vsub.f32 %v877, %v878
    %v880 = vand.u32 %v879, 4294901760
    %881 = vmatpush1.msra.mxu0 %v880
    %882 = vmatprep.subr.mxu0 0.0
    %v883 = vand.u32 %v721, 4294901760
    %v884 = vsub.f32 %v721, %v883
    %v885 = vand.u32 %v884, 4294901760
    %v886 = vsub.f32 %v884, %v885
    %v887 = vand.u32 %v886, 4294901760
    %888 = vmatpush1.msra.mxu0 %v887
    %889 = vmatprep.subr.mxu0 0.0
    %v890 = vand.u32 %v722, 4294901760
    %v891 = vsub.f32 %v722, %v890
    %v892 = vand.u32 %v891, 4294901760
    %v893 = vsub.f32 %v891, %v892
    %v894 = vand.u32 %v893, 4294901760
    %895 = vmatpush1.msra.mxu0 %v894
    %896 = vmatprep.subr.mxu0 0.0
    %v897 = vand.u32 %v723, 4294901760
    %v898 = vsub.f32 %v723, %v897
    %v899 = vand.u32 %v898, 4294901760
    %v900 = vsub.f32 %v898, %v899
    %v901 = vand.u32 %v900, 4294901760
    %902 = vmatpush1.msra.mxu0 %v901
    %903 = vmatprep.subr.mxu0 0.0
    %v904 = vand.u32 %v724, 4294901760
    %v905 = vsub.f32 %v724, %v904
    %v906 = vand.u32 %v905, 4294901760
    %v907 = vsub.f32 %v905, %v906
    %v908 = vand.u32 %v907, 4294901760
    %909 = vmatpush1.msra.mxu0 %v908
    %910 = vmatprep.subr.mxu0 0.0
    %v911 = vand.u32 %v725, 4294901760
    %v912 = vsub.f32 %v725, %v911
    %v913 = vand.u32 %v912, 4294901760
    %v914 = vsub.f32 %v912, %v913
    %v915 = vand.u32 %v914, 4294901760
    %916 = vmatpush1.msra.mxu0 %v915
    %917 = vmatprep.subr.mxu0 0.0
    %v918 = vand.u32 %v726, 4294901760
    %v919 = vsub.f32 %v726, %v918
    %v920 = vand.u32 %v919, 4294901760
    %v921 = vsub.f32 %v919, %v920
    %v922 = vand.u32 %v921, 4294901760
    %923 = vmatpush1.msra.mxu0 %v922
    %924 = vmatprep.subr.mxu0 0.0
    %v925 = vand.u32 %v727, 4294901760
    %v926 = vsub.f32 %v727, %v925
    %v927 = vand.u32 %v926, 4294901760
    %v928 = vsub.f32 %v926, %v927
    %v929 = vand.u32 %v928, 4294901760
    %930 = vmatpush1.msra.mxu0 %v929
    %931 = vmatprep.subr.mxu0 0.0
    %932 = vmatpush1.msra.mxu0 0.0
    %933 = vmatprep.subr.mxu0 0.0
    %934 = vmatpush1.msra.mxu0 0.0
    %935 = vmatprep.subr.mxu0 0.0
    %936 = vmatpush1.msra.mxu0 0.0
    %937 = vmatprep.subr.mxu0 0.0
    %938 = vmatpush1.msra.mxu0 0.0
    %939 = vmatprep.subr.mxu0 0.0
    %940 = vmatpush1.msra.mxu0 0.0
    %941 = vmatprep.subr.mxu0 0.0
    %942 = vmatpush1.msra.mxu0 0.0
    %943 = vmatprep.subr.mxu0 0.0
    %944 = vmatpush1.msra.mxu0 0.0
    %945 = vmatprep.subr.mxu0 0.0
    %946 = vmatpush1.msra.mxu0 0.0
    %947 = vmatprep.subr.mxu0 0.0
    %948 = vmatpush1.msra.mxu0 0.0
    %949 = vmatprep.subr.mxu0 0.0
    %950 = vmatpush1.msra.mxu0 0.0
    %951 = vmatprep.subr.mxu0 0.0
    %952 = vmatpush1.msra.mxu0 0.0
    %953 = vmatprep.subr.mxu0 0.0
    %954 = vmatpush1.msra.mxu0 0.0
    %955 = vmatprep.subr.mxu0 0.0
    %956 = vmatpush1.msra.mxu0 0.0
    %957 = vmatprep.subr.mxu0 0.0
    %958 = vmatpush1.msra.mxu0 0.0
    %959 = vmatprep.subr.mxu0 0.0
    %960 = vmatpush1.msra.mxu0 0.0
    %961 = vmatprep.subr.mxu0 0.0
    %962 = vmatpush1.msra.mxu0 0.0
    %963 = vmatprep.mubr.f32.mxu0 0.0
    %v964 = vand.u32 %v709, 4294901760
    %965 = vmatmul.mubr.f32.gmra.mrb[0].mxu0 %v964
    %v966 = vpop.f32.mrb[0].mxu0
    %v967 = vadd.f32 %v816, %v966
    %v968 = vpop.f32.mrb[0].mxu0
    %969 = vdwg.mxu0
    %970 = vmatprep.subr.mxu0 0.0
    %v971 = vand.u32 %v712, 4294901760
    %v972 = vsub.f32 %v712, %v971
    %973 = vmatpush1.msra.mxu0 %v972
    %974 = vmatprep.subr.mxu0 0.0
    %v975 = vand.u32 %v713, 4294901760
    %v976 = vsub.f32 %v713, %v975
    %977 = vmatpush1.msra.mxu0 %v976
    %978 = vmatprep.subr.mxu0 0.0
    %v979 = vand.u32 %v714, 4294901760
    %v980 = vsub.f32 %v714, %v979
    %981 = vmatpush1.msra.mxu0 %v980
    %982 = vmatprep.subr.mxu0 0.0
    %v983 = vand.u32 %v715, 4294901760
    %v984 = vsub.f32 %v715, %v983
    %985 = vmatpush1.msra.mxu0 %v984
    %986 = vmatprep.subr.mxu0 0.0
    %v987 = vand.u32 %v716, 4294901760
    %v988 = vsub.f32 %v716, %v987
    %989 = vmatpush1.msra.mxu0 %v988
    %990 = vmatprep.subr.mxu0 0.0
    %v991 = vand.u32 %v717, 4294901760
    %v992 = vsub.f32 %v717, %v991
    %993 = vmatpush1.msra.mxu0 %v992
    %994 = vmatprep.subr.mxu0 0.0
    %v995 = vand.u32 %v718, 4294901760
    %v996 = vsub.f32 %v718, %v995
    %997 = vmatpush1.msra.mxu0 %v996
    %998 = vmatprep.subr.mxu0 0.0
    %v999 = vand.u32 %v719, 4294901760
    %v1000 = vsub.f32 %v719, %v999
    %1001 = vmatpush1.msra.mxu0 %v1000
    %1002 = vmatprep.subr.mxu0 0.0
    %v1003 = vand.u32 %v720, 4294901760
    %v1004 = vsub.f32 %v720, %v1003
    %1005 = vmatpush1.msra.mxu0 %v1004
    %1006 = vmatprep.subr.mxu0 0.0
    %v1007 = vand.u32 %v721, 4294901760
    %v1008 = vsub.f32 %v721, %v1007
    %1009 = vmatpush1.msra.mxu0 %v1008
    %1010 = vmatprep.subr.mxu0 0.0
    %v1011 = vand.u32 %v722, 4294901760
    %v1012 = vsub.f32 %v722, %v1011
    %1013 = vmatpush1.msra.mxu0 %v1012
    %1014 = vmatprep.subr.mxu0 0.0
    %v1015 = vand.u32 %v723, 4294901760
    %v1016 = vsub.f32 %v723, %v1015
    %1017 = vmatpush1.msra.mxu0 %v1016
    %1018 = vmatprep.subr.mxu0 0.0
    %v1019 = vand.u32 %v724, 4294901760
    %v1020 = vsub.f32 %v724, %v1019
    %1021 = vmatpush1.msra.mxu0 %v1020
    %1022 = vmatprep.subr.mxu0 0.0
    %v1023 = vand.u32 %v725, 4294901760
    %v1024 = vsub.f32 %v725, %v1023
    %1025 = vmatpush1.msra.mxu0 %v1024
    %1026 = vmatprep.subr.mxu0 0.0
    %v1027 = vand.u32 %v726, 4294901760
    %v1028 = vsub.f32 %v726, %v1027
    %1029 = vmatpush1.msra.mxu0 %v1028
    %1030 = vmatprep.subr.mxu0 0.0
    %v1031 = vand.u32 %v727, 4294901760
    %v1032 = vsub.f32 %v727, %v1031
    %1033 = vmatpush1.msra.mxu0 %v1032
    %1034 = vmatprep.subr.mxu0 0.0
    %1035 = vmatpush1.msra.mxu0 0.0
    %1036 = vmatprep.subr.mxu0 0.0
    %1037 = vmatpush1.msra.mxu0 0.0
    %1038 = vmatprep.subr.mxu0 0.0
    %1039 = vmatpush1.msra.mxu0 0.0
    %1040 = vmatprep.subr.mxu0 0.0
    %1041 = vmatpush1.msra.mxu0 0.0
    %1042 = vmatprep.subr.mxu0 0.0
    %1043 = vmatpush1.msra.mxu0 0.0
    %1044 = vmatprep.subr.mxu0 0.0
    %1045 = vmatpush1.msra.mxu0 0.0
    %1046 = vmatprep.subr.mxu0 0.0
    %1047 = vmatpush1.msra.mxu0 0.0
    %1048 = vmatprep.subr.mxu0 0.0
    %1049 = vmatpush1.msra.mxu0 0.0
    %1050 = vmatprep.subr.mxu0 0.0
    %1051 = vmatpush1.msra.mxu0 0.0
    %1052 = vmatprep.subr.mxu0 0.0
    %1053 = vmatpush1.msra.mxu0 0.0
    %1054 = vmatprep.subr.mxu0 0.0
    %1055 = vmatpush1.msra.mxu0 0.0
    %1056 = vmatprep.subr.mxu0 0.0
    %1057 = vmatpush1.msra.mxu0 0.0
    %1058 = vmatprep.subr.mxu0 0.0
    %1059 = vmatpush1.msra.mxu0 0.0
    %1060 = vmatprep.subr.mxu0 0.0
    %1061 = vmatpush1.msra.mxu0 0.0
    %1062 = vmatprep.subr.mxu0 0.0
    %1063 = vmatpush1.msra.mxu0 0.0
    %1064 = vmatprep.subr.mxu0 0.0
    %1065 = vmatpush1.msra.mxu0 0.0
    %1066 = vmatprep.mubr.f32.mxu0 0.0
    %v1067 = vand.u32 %v709, 4294901760
    %v1068 = vsub.f32 %v709, %v1067
    %1069 = vmatmul.mubr.f32.gmra.mrb[0].mxu0 %v1068
    %v1070 = vpop.f32.mrb[0].mxu0
    %v1071 = vadd.f32 %v967, %v1070
    %v1072 = vpop.f32.mrb[0].mxu0
    %1073 = vdwg.mxu0
    %1074 = vmatprep.subr.mxu0 0.0
    %v1075 = vand.u32 %v712, 4294901760
    %1076 = vmatpush1.msra.mxu0 %v1075
    %1077 = vmatprep.subr.mxu0 0.0
    %v1078 = vand.u32 %v713, 4294901760
    %1079 = vmatpush1.msra.mxu0 %v1078
    %1080 = vmatprep.subr.mxu0 0.0
    %v1081 = vand.u32 %v714, 4294901760
    %1082 = vmatpush1.msra.mxu0 %v1081
    %1083 = vmatprep.subr.mxu0 0.0
    %v1084 = vand.u32 %v715, 4294901760
    %1085 = vmatpush1.msra.mxu0 %v1084
    %1086 = vmatprep.subr.mxu0 0.0
    %v1087 = vand.u32 %v716, 4294901760
    %1088 = vmatpush1.msra.mxu0 %v1087
    %1089 = vmatprep.subr.mxu0 0.0
    %v1090 = vand.u32 %v717, 4294901760
    %1091 = vmatpush1.msra.mxu0 %v1090
    %1092 = vmatprep.subr.mxu0 0.0
    %v1093 = vand.u32 %v718, 4294901760
    %1094 = vmatpush1.msra.mxu0 %v1093
    %1095 = vmatprep.subr.mxu0 0.0
    %v1096 = vand.u32 %v719, 4294901760
    %1097 = vmatpush1.msra.mxu0 %v1096
    %1098 = vmatprep.subr.mxu0 0.0
    %v1099 = vand.u32 %v720, 4294901760
    %1100 = vmatpush1.msra.mxu0 %v1099
    %1101 = vmatprep.subr.mxu0 0.0
    %v1102 = vand.u32 %v721, 4294901760
    %1103 = vmatpush1.msra.mxu0 %v1102
    %1104 = vmatprep.subr.mxu0 0.0
    %v1105 = vand.u32 %v722, 4294901760
    %1106 = vmatpush1.msra.mxu0 %v1105
    %1107 = vmatprep.subr.mxu0 0.0
    %v1108 = vand.u32 %v723, 4294901760
    %1109 = vmatpush1.msra.mxu0 %v1108
    %1110 = vmatprep.subr.mxu0 0.0
    %v1111 = vand.u32 %v724, 4294901760
    %1112 = vmatpush1.msra.mxu0 %v1111
    %1113 = vmatprep.subr.mxu0 0.0
    %v1114 = vand.u32 %v725, 4294901760
    %1115 = vmatpush1.msra.mxu0 %v1114
    %1116 = vmatprep.subr.mxu0 0.0
    %v1117 = vand.u32 %v726, 4294901760
    %1118 = vmatpush1.msra.mxu0 %v1117
    %1119 = vmatprep.subr.mxu0 0.0
    %v1120 = vand.u32 %v727, 4294901760
    %1121 = vmatpush1.msra.mxu0 %v1120
    %1122 = vmatprep.subr.mxu0 0.0
    %1123 = vmatpush1.msra.mxu0 0.0
    %1124 = vmatprep.subr.mxu0 0.0
    %1125 = vmatpush1.msra.mxu0 0.0
    %1126 = vmatprep.subr.mxu0 0.0
    %1127 = vmatpush1.msra.mxu0 0.0
    %1128 = vmatprep.subr.mxu0 0.0
    %1129 = vmatpush1.msra.mxu0 0.0
    %1130 = vmatprep.subr.mxu0 0.0
    %1131 = vmatpush1.msra.mxu0 0.0
    %1132 = vmatprep.subr.mxu0 0.0
    %1133 = vmatpush1.msra.mxu0 0.0
    %1134 = vmatprep.subr.mxu0 0.0
    %1135 = vmatpush1.msra.mxu0 0.0
    %1136 = vmatprep.subr.mxu0 0.0
    %1137 = vmatpush1.msra.mxu0 0.0
    %1138 = vmatprep.subr.mxu0 0.0
    %1139 = vmatpush1.msra.mxu0 0.0
    %1140 = vmatprep.subr.mxu0 0.0
    %1141 = vmatpush1.msra.mxu0 0.0
    %1142 = vmatprep.subr.mxu0 0.0
    %1143 = vmatpush1.msra.mxu0 0.0
    %1144 = vmatprep.subr.mxu0 0.0
    %1145 = vmatpush1.msra.mxu0 0.0
    %1146 = vmatprep.subr.mxu0 0.0
    %1147 = vmatpush1.msra.mxu0 0.0
    %1148 = vmatprep.subr.mxu0 0.0
    %1149 = vmatpush1.msra.mxu0 0.0
    %1150 = vmatprep.subr.mxu0 0.0
    %1151 = vmatpush1.msra.mxu0 0.0
    %1152 = vmatprep.subr.mxu0 0.0
    %1153 = vmatpush1.msra.mxu0 0.0
    %1154 = vmatprep.mubr.f32.mxu0 0.0
    %v1155 = vand.u32 %v709, 4294901760
    %v1156 = vsub.f32 %v709, %v1155
    %v1157 = vand.u32 %v1156, 4294901760
    %1158 = vmatmul.mubr.f32.gmra.mrb[0].mxu0 %v1157
    %v1159 = vpop.f32.mrb[0].mxu0
    %v1160 = vadd.f32 %v1071, %v1159
    %v1161 = vpop.f32.mrb[0].mxu0
    %1162 = vdwg.mxu0
    %1163 = vmatprep.subr.mxu0 0.0
    %v1164 = vand.u32 %v712, 4294901760
    %v1165 = vsub.f32 %v712, %v1164
    %v1166 = vand.u32 %v1165, 4294901760
    %1167 = vmatpush1.msra.mxu0 %v1166
    %1168 = vmatprep.subr.mxu0 0.0
    %v1169 = vand.u32 %v713, 4294901760
    %v1170 = vsub.f32 %v713, %v1169
    %v1171 = vand.u32 %v1170, 4294901760
    %1172 = vmatpush1.msra.mxu0 %v1171
    %1173 = vmatprep.subr.mxu0 0.0
    %v1174 = vand.u32 %v714, 4294901760
    %v1175 = vsub.f32 %v714, %v1174
    %v1176 = vand.u32 %v1175, 4294901760
    %1177 = vmatpush1.msra.mxu0 %v1176
    %1178 = vmatprep.subr.mxu0 0.0
    %v1179 = vand.u32 %v715, 4294901760
    %v1180 = vsub.f32 %v715, %v1179
    %v1181 = vand.u32 %v1180, 4294901760
    %1182 = vmatpush1.msra.mxu0 %v1181
    %1183 = vmatprep.subr.mxu0 0.0
    %v1184 = vand.u32 %v716, 4294901760
    %v1185 = vsub.f32 %v716, %v1184
    %v1186 = vand.u32 %v1185, 4294901760
    %1187 = vmatpush1.msra.mxu0 %v1186
    %1188 = vmatprep.subr.mxu0 0.0
    %v1189 = vand.u32 %v717, 4294901760
    %v1190 = vsub.f32 %v717, %v1189
    %v1191 = vand.u32 %v1190, 4294901760
    %1192 = vmatpush1.msra.mxu0 %v1191
    %1193 = vmatprep.subr.mxu0 0.0
    %v1194 = vand.u32 %v718, 4294901760
    %v1195 = vsub.f32 %v718, %v1194
    %v1196 = vand.u32 %v1195, 4294901760
    %1197 = vmatpush1.msra.mxu0 %v1196
    %1198 = vmatprep.subr.mxu0 0.0
    %v1199 = vand.u32 %v719, 4294901760
    %v1200 = vsub.f32 %v719, %v1199
    %v1201 = vand.u32 %v1200, 4294901760
    %1202 = vmatpush1.msra.mxu0 %v1201
    %1203 = vmatprep.subr.mxu0 0.0
    %v1204 = vand.u32 %v720, 4294901760
    %v1205 = vsub.f32 %v720, %v1204
    %v1206 = vand.u32 %v1205, 4294901760
    %1207 = vmatpush1.msra.mxu0 %v1206
    %1208 = vmatprep.subr.mxu0 0.0
    %v1209 = vand.u32 %v721, 4294901760
    %v1210 = vsub.f32 %v721, %v1209
    %v1211 = vand.u32 %v1210, 4294901760
    %1212 = vmatpush1.msra.mxu0 %v1211
    %1213 = vmatprep.subr.mxu0 0.0
    %v1214 = vand.u32 %v722, 4294901760
    %v1215 = vsub.f32 %v722, %v1214
    %v1216 = vand.u32 %v1215, 4294901760
    %1217 = vmatpush1.msra.mxu0 %v1216
    %1218 = vmatprep.subr.mxu0 0.0
    %v1219 = vand.u32 %v723, 4294901760
    %v1220 = vsub.f32 %v723, %v1219
    %v1221 = vand.u32 %v1220, 4294901760
    %1222 = vmatpush1.msra.mxu0 %v1221
    %1223 = vmatprep.subr.mxu0 0.0
    %v1224 = vand.u32 %v724, 4294901760
    %v1225 = vsub.f32 %v724, %v1224
    %v1226 = vand.u32 %v1225, 4294901760
    %1227 = vmatpush1.msra.mxu0 %v1226
    %1228 = vmatprep.subr.mxu0 0.0
    %v1229 = vand.u32 %v725, 4294901760
    %v1230 = vsub.f32 %v725, %v1229
    %v1231 = vand.u32 %v1230, 4294901760
    %1232 = vmatpush1.msra.mxu0 %v1231
    %1233 = vmatprep.subr.mxu0 0.0
    %v1234 = vand.u32 %v726, 4294901760
    %v1235 = vsub.f32 %v726, %v1234
    %v1236 = vand.u32 %v1235, 4294901760
    %1237 = vmatpush1.msra.mxu0 %v1236
    %1238 = vmatprep.subr.mxu0 0.0
    %v1239 = vand.u32 %v727, 4294901760
    %v1240 = vsub.f32 %v727, %v1239
    %v1241 = vand.u32 %v1240, 4294901760
    %1242 = vmatpush1.msra.mxu0 %v1241
    %1243 = vmatprep.subr.mxu0 0.0
    %1244 = vmatpush1.msra.mxu0 0.0
    %1245 = vmatprep.subr.mxu0 0.0
    %1246 = vmatpush1.msra.mxu0 0.0
    %1247 = vmatprep.subr.mxu0 0.0
    %1248 = vmatpush1.msra.mxu0 0.0
    %1249 = vmatprep.subr.mxu0 0.0
    %1250 = vmatpush1.msra.mxu0 0.0
    %1251 = vmatprep.subr.mxu0 0.0
    %1252 = vmatpush1.msra.mxu0 0.0
    %1253 = vmatprep.subr.mxu0 0.0
    %1254 = vmatpush1.msra.mxu0 0.0
    %1255 = vmatprep.subr.mxu0 0.0
    %1256 = vmatpush1.msra.mxu0 0.0
    %1257 = vmatprep.subr.mxu0 0.0
    %1258 = vmatpush1.msra.mxu0 0.0
    %1259 = vmatprep.subr.mxu0 0.0
    %1260 = vmatpush1.msra.mxu0 0.0
    %1261 = vmatprep.subr.mxu0 0.0
    %1262 = vmatpush1.msra.mxu0 0.0
    %1263 = vmatprep.subr.mxu0 0.0
    %1264 = vmatpush1.msra.mxu0 0.0
    %1265 = vmatprep.subr.mxu0 0.0
    %1266 = vmatpush1.msra.mxu0 0.0
    %1267 = vmatprep.subr.mxu0 0.0
    %1268 = vmatpush1.msra.mxu0 0.0
    %1269 = vmatprep.subr.mxu0 0.0
    %1270 = vmatpush1.msra.mxu0 0.0
    %1271 = vmatprep.subr.mxu0 0.0
    %1272 = vmatpush1.msra.mxu0 0.0
    %1273 = vmatprep.subr.mxu0 0.0
    %1274 = vmatpush1.msra.mxu0 0.0
    %1275 = vmatprep.mubr.f32.mxu0 0.0
    %v1276 = vand.u32 %v709, 4294901760
    %1277 = vmatmul.mubr.f32.gmra.mrb[0].mxu0 %v1276
    %v1278 = vpop.f32.mrb[0].mxu0
    %v1279 = vadd.f32 %v1160, %v1278
    %v1280 = vpop.f32.mrb[0].mxu0
    %1281 = vdwg.mxu0
    %1282 = vmatprep.subr.mxu0 0.0
    %v1283 = vand.u32 %v712, 4294901760
    %1284 = vmatpush1.msra.mxu0 %v1283
    %1285 = vmatprep.subr.mxu0 0.0
    %v1286 = vand.u32 %v713, 4294901760
    %1287 = vmatpush1.msra.mxu0 %v1286
    %1288 = vmatprep.subr.mxu0 0.0
    %v1289 = vand.u32 %v714, 4294901760
    %1290 = vmatpush1.msra.mxu0 %v1289
    %1291 = vmatprep.subr.mxu0 0.0
    %v1292 = vand.u32 %v715, 4294901760
    %1293 = vmatpush1.msra.mxu0 %v1292
    %1294 = vmatprep.subr.mxu0 0.0
    %v1295 = vand.u32 %v716, 4294901760
    %1296 = vmatpush1.msra.mxu0 %v1295
    %1297 = vmatprep.subr.mxu0 0.0
    %v1298 = vand.u32 %v717, 4294901760
    %1299 = vmatpush1.msra.mxu0 %v1298
    %1300 = vmatprep.subr.mxu0 0.0
    %v1301 = vand.u32 %v718, 4294901760
    %1302 = vmatpush1.msra.mxu0 %v1301
    %1303 = vmatprep.subr.mxu0 0.0
    %v1304 = vand.u32 %v719, 4294901760
    %1305 = vmatpush1.msra.mxu0 %v1304
    %1306 = vmatprep.subr.mxu0 0.0
    %v1307 = vand.u32 %v720, 4294901760
    %1308 = vmatpush1.msra.mxu0 %v1307
    %1309 = vmatprep.subr.mxu0 0.0
    %v1310 = vand.u32 %v721, 4294901760
    %1311 = vmatpush1.msra.mxu0 %v1310
    %1312 = vmatprep.subr.mxu0 0.0
    %v1313 = vand.u32 %v722, 4294901760
    %1314 = vmatpush1.msra.mxu0 %v1313
    %1315 = vmatprep.subr.mxu0 0.0
    %v1316 = vand.u32 %v723, 4294901760
    %1317 = vmatpush1.msra.mxu0 %v1316
    %1318 = vmatprep.subr.mxu0 0.0
    %v1319 = vand.u32 %v724, 4294901760
    %1320 = vmatpush1.msra.mxu0 %v1319
    %1321 = vmatprep.subr.mxu0 0.0
    %v1322 = vand.u32 %v725, 4294901760
    %1323 = vmatpush1.msra.mxu0 %v1322
    %1324 = vmatprep.subr.mxu0 0.0
    %v1325 = vand.u32 %v726, 4294901760
    %1326 = vmatpush1.msra.mxu0 %v1325
    %1327 = vmatprep.subr.mxu0 0.0
    %v1328 = vand.u32 %v727, 4294901760
    %1329 = vmatpush1.msra.mxu0 %v1328
    %1330 = vmatprep.subr.mxu0 0.0
    %1331 = vmatpush1.msra.mxu0 0.0
    %1332 = vmatprep.subr.mxu0 0.0
    %1333 = vmatpush1.msra.mxu0 0.0
    %1334 = vmatprep.subr.mxu0 0.0
    %1335 = vmatpush1.msra.mxu0 0.0
    %1336 = vmatprep.subr.mxu0 0.0
    %1337 = vmatpush1.msra.mxu0 0.0
    %1338 = vmatprep.subr.mxu0 0.0
    %1339 = vmatpush1.msra.mxu0 0.0
    %1340 = vmatprep.subr.mxu0 0.0
    %1341 = vmatpush1.msra.mxu0 0.0
    %1342 = vmatprep.subr.mxu0 0.0
    %1343 = vmatpush1.msra.mxu0 0.0
    %1344 = vmatprep.subr.mxu0 0.0
    %1345 = vmatpush1.msra.mxu0 0.0
    %1346 = vmatprep.subr.mxu0 0.0
    %1347 = vmatpush1.msra.mxu0 0.0
    %1348 = vmatprep.subr.mxu0 0.0
    %1349 = vmatpush1.msra.mxu0 0.0
    %1350 = vmatprep.subr.mxu0 0.0
    %1351 = vmatpush1.msra.mxu0 0.0
    %1352 = vmatprep.subr.mxu0 0.0
    %1353 = vmatpush1.msra.mxu0 0.0
    %1354 = vmatprep.subr.mxu0 0.0
    %1355 = vmatpush1.msra.mxu0 0.0
    %1356 = vmatprep.subr.mxu0 0.0
    %1357 = vmatpush1.msra.mxu0 0.0
    %1358 = vmatprep.subr.mxu0 0.0
    %1359 = vmatpush1.msra.mxu0 0.0
    %1360 = vmatprep.subr.mxu0 0.0
    %1361 = vmatpush1.msra.mxu0 0.0
    %1362 = vmatprep.mubr.f32.mxu0 0.0
    %v1363 = vand.u32 %v709, 4294901760
    %1364 = vmatmul.mubr.f32.gmra.mrb[0].mxu0 %v1363
    %v1365 = vpop.f32.mrb[0].mxu0
    %v1366 = vadd.f32 %v1279, %v1365
    %v1367 = vpop.f32.mrb[0].mxu0
    %1368 = vdwg.mxu0
    %1369 = vst [vmem:[#allocation8] sm:$0xff] %v1366
    // Predicated region
    $region26: #{tpu_custom_call.1} parent=1 // pred_check
      _
    $region27: #{tpu_custom_call.1} parent=1 // pred_check_branch
      %1371 = sbr.rel (0) target = $region29
    $region28: #{tpu_custom_call.1} parent=1 // pred_region
      %s1373 = ssub.s32 128, 128
      %1374 = vsyncadd [#allocation4], %s1373
      %s1376 = sshll.u32 [#allocation8], 4
      %s1377 = int_to_ptr.vmem [resolvable:$true] %s1376
      %1379 = dma.vmem_to_hbm [thread:$0]  %s1377, 128, %s3, [#allocation4]
    $region29: #{tpu_custom_call.1} parent=1 // pred_fallthru
      _
    // Predicated region
    $region30: #{tpu_custom_call.1} parent=1 // pred_check
      _
    $region31: #{tpu_custom_call.1} parent=1 // pred_check_branch
      %1381 = sbr.rel (0) target = $region33
    $region32: #{tpu_custom_call.1} parent=1 // pred_region
      %1382 = dma.done [#allocation4], 128
    $region33: #{tpu_custom_call.1} parent=1 // pred_fallthru
      _
    %1383 = vsyncpa [#allocation3], 1
    %1384 = vsyncpa [#allocation6], 1
    %1385 = vsyncpa [#allocation4], 1

</llo_original>
